<compile_context>
chip_gen: v5e
topology: v5e:2x2
jax: 0.10.0
libtpu: 0.0.40
codegen_flags: <defaults>
</compile_context>

<pallas_src>
import functools
import math

import jax
import jax.numpy as jnp
from jax.experimental import pallas as pl
from jax.experimental.pallas import tpu as pltpu

_MIB = 1 << 20


def _round_up(x, m):
    return (x + m - 1) // m * m


def _device_kind():
    try:
        return jax.devices()[0].device_kind.lower()
    except Exception:
        return ""


def _num_tensorcores_per_chip():
    kind = _device_kind()
    if "v7" in kind or "v4" in kind:
        return 2
    # v5p ("TPU v5"/"v5p") is megacore; v5e ("TPU v5 lite"/"v5e") is not.
    if "v5" in kind and "lite" not in kind and "v5e" not in kind:
        return 2
    return 1


def _vmem_budget_bytes():
    kind = _device_kind()
    # v7x has 64 MiB physical VMEM per TensorCore; v5e/v6e have 128 MiB.
    return (48 * _MIB) if "v7" in kind else (100 * _MIB)


# ---------------------------------------------------------------------------
# Kernel
# ---------------------------------------------------------------------------
def _self_attention_kernel(x_ref, wqkv_ref, o_ref, *,
                           d_k, dk_pad, d_v, use_mask, diagnol, mask_value):
    bt, s, d = x_ref.shape
    f = wqkv_ref.shape[-1]

    x = x_ref[...]                          # (bt, S, D), input dtype
    w = wqkv_ref[...]                       # (D, F),     input dtype

    # Fused QKV projection as ONE flat 2D matmul: (bt*S, D) @ (D, F).
    # No per-batch weight broadcast; M = bt*S rows on the MXU.
    qkv = jnp.dot(x.reshape(bt * s, d), w,
                  preferred_element_type=jnp.float32).reshape(bt, s, f)

    mxu_dtype = x.dtype                     # keep bf16 operands bf16 on MXU
    scale = jnp.float32(1.0 / math.sqrt(d_k))
    # 1/sqrt(d_k) folded into Q once: O(S*d) VPU work instead of O(S^2).
    q = (qkv[..., :dk_pad] * scale).astype(mxu_dtype)        # (bt, S, dk_pad)
    k = qkv[..., dk_pad:2 * dk_pad].astype(mxu_dtype)        # (bt, S, dk_pad)
    v = qkv[..., 2 * dk_pad:].astype(mxu_dtype)              # (bt, S, dv_pad)

    # Q @ K^T with the transpose folded into the MXU contraction (no XLU).
    # Zero-padded feature columns contribute nothing to the dot product.
    sim = jnp.einsum('bqd,bkd->bqk', q, k,
                     preferred_element_type=jnp.float32)     # (bt, S, S) f32

    if use_mask:
        rows = jax.lax.broadcasted_iota(jnp.int32, (s, s), 0)
        cols = jax.lax.broadcasted_iota(jnp.int32, (s, s), 1)
        # Single select; large finite negative (never -inf, so no
        # (-inf) - (-inf) NaNs in the stable softmax below).
        sim = jnp.where((cols - rows >= diagnol)[None, :, :],
                        jnp.float32(mask_value), sim)

    # Numerically-stable softmax in f32; normalization deferred past P@V.
    m = jnp.max(sim, axis=-1, keepdims=True)
    p = jnp.exp(sim - m)
    denom = jnp.sum(p, axis=-1, keepdims=True)

    out = jnp.einsum('bqk,bkd->bqd', p.astype(mxu_dtype), v,
                     preferred_element_type=jnp.float32)     # (bt, S, dv_pad)

    if jnp.dtype(o_ref.dtype) == jnp.float32:
        # Exact divide: denom is only bt*S scalars, so this is essentially
        # free and keeps full f32 accuracy.
        out = out / denom
    else:
        out = out * pl.reciprocal(denom, approx=True)        # EUP slot

    # Store exactly d_v lanes: the output block's last dim equals the full
    # array dim, so no wrapper-side slice / extra HBM pass is needed.
    o_ref[...] = out[..., :d_v].astype(o_ref.dtype)


# ---------------------------------------------------------------------------
# Weight packing (hoist out of the hot path; do once per parameter set)
# ---------------------------------------------------------------------------
def pack_qkv_weights(w_q, w_k, w_v, dtype=None):
    """Pack W_q / W_k / W_v into one zero-padded, lane-dense (D, F) weight.

    F = 2 * round_up(d_k, 128) + round_up(d_v, 128). Padded columns are zero,
    so results are unchanged. Call ONCE and reuse across forward passes.
    """
    D, d_k = w_q.shape
    d_v = w_v.shape[1]
    if dtype is None:
        dtype = w_q.dtype
    dk_pad = _round_up(d_k, 128)
    dv_pad = _round_up(d_v, 128)

    def _pad(w, width):
        buf = jnp.zeros((D, width), dtype)
        return buf.at[:, :w.shape[1]].set(w.astype(dtype))

    return jnp.concatenate(
        [_pad(w_q, dk_pad), _pad(w_k, dk_pad), _pad(w_v, dv_pad)], axis=1)


# ---------------------------------------------------------------------------
# VMEM accounting / batch-tile selection
# ---------------------------------------------------------------------------
def _step_vmem_bytes(bt, S, D, F, d_v, dv_pad, itemsize):
    in_block = 2 * bt * S * D * itemsize        # double-buffered input tile
    w_block = 1 * D * F * itemsize              # single-buffered weight
    out_block = 2 * bt * S * d_v * itemsize     # double-buffered output tile
    qkv_f32 = bt * S * F * 4                    # projection accumulator
    qkv_cast = bt * S * F * itemsize            # q/k/v in MXU dtype
    scores = 2 * bt * S * S * 4                 # sim + p (f32)
    acc = bt * S * dv_pad * 4                   # P@V accumulator (f32)
    return in_block + w_block + out_block + qkv_f32 + qkv_cast + scores + acc


def _pick_batch_block(B, S, D, F, d_v, dv_pad, itemsize, num_tc, budget):
    divisors = [c for c in range(B, 0, -1) if B % c == 0]
    for bt in divisors:
        # Multi-TC chips: keep at least num_tc grid steps so the "parallel"
        # batch-tile axis actually shards across the cores.
        if num_tc >= 2 and B >= num_tc and B // bt < num_tc:
            continue
        if _step_vmem_bytes(bt, S, D, F, d_v, dv_pad, itemsize) <= budget:
            return bt
    return 1


# ---------------------------------------------------------------------------
# Wrappers
# ---------------------------------------------------------------------------
def self_attention_packed(embeddings, w_qkv, *, d_k, d_v, mask=False,
                          diagnol=1, batch_block=None):
    """Forward pass using a pre-packed QKV weight (see pack_qkv_weights)."""
    if not isinstance(mask, (bool, type(None))):
        raise TypeError(
            f"`mask` must be a static Python bool or None, got {type(mask)}")
    use_mask = bool(mask)

    B, S, D = embeddings.shape
    dtype = embeddings.dtype
    dk_pad = _round_up(d_k, 128)
    dv_pad = _round_up(d_v, 128)
    F = 2 * dk_pad + dv_pad
    assert w_qkv.shape == (D, F), (w_qkv.shape, (D, F))

    itemsize = jnp.dtype(dtype).itemsize
    num_tc = _num_tensorcores_per_chip()
    budget = _vmem_budget_bytes()

    if batch_block is None:
        bt = _pick_batch_block(B, S, D, F, d_v, dv_pad, itemsize, num_tc,
                               budget)
    else:
        bt = batch_block
    assert B % bt == 0, "batch_block must divide the batch size"

    vmem_limit = int(min(
        budget,
        max(32 * _MIB,
            2 * _step_vmem_bytes(bt, S, D, F, d_v, dv_pad, itemsize))))

    kernel = functools.partial(
        _self_attention_kernel,
        d_k=d_k, dk_pad=dk_pad, d_v=d_v,
        use_mask=use_mask, diagnol=diagnol, mask_value=-1e30)

    def build(single_buffer_weight):
        if single_buffer_weight:
            # Weight index_map is constant -> second pipeline buffer is pure
            # VMEM waste; request single-buffering.
            w_spec = pl.BlockSpec((D, F), lambda b: (0, 0),
                                  pipeline_mode=pl.Buffered(1))
        else:
            w_spec = pl.BlockSpec((D, F), lambda b: (0, 0))
        return pl.pallas_call(
            kernel,
            out_shape=jax.ShapeDtypeStruct((B, S, d_v), dtype),
            grid_spec=pltpu.PrefetchScalarGridSpec(
                num_scalar_prefetch=0,
                grid=(B // bt,),
                in_specs=[
                    pl.BlockSpec((bt, S, D), lambda b: (b, 0, 0)),
                    w_spec,
                ],
                out_specs=pl.BlockSpec((bt, S, d_v), lambda b: (b, 0, 0)),
            ),
            compiler_params=pltpu.CompilerParams(
                # Batch-tile axis is independent -> shard across TCs.
                dimension_semantics=("parallel",),
                vmem_limit_bytes=vmem_limit,
            ),
        )

    try:
        return build(True)(embeddings, w_qkv)
    except Exception:
        # Older jax without single-buffer pipeline_mode: fall back to the
        # default double-buffered weight (correctness identical).
        return build(False)(embeddings, w_qkv)


def self_attention(embeddings, w_q, w_k, w_v, *, mask=False, diagnol=1,
                   batch_block=None):
    """Convenience wrapper: packs the weights then runs the kernel.

    For production use, call pack_qkv_weights() once and reuse
    self_attention_packed() so the packing stays out of the hot path.
    """
    w_qkv = pack_qkv_weights(w_q, w_k, w_v, dtype=embeddings.dtype)
    return self_attention_packed(
        embeddings, w_qkv, d_k=w_q.shape[1], d_v=w_v.shape[1],
        mask=mask, diagnol=diagnol, batch_block=batch_block)


# ---------------------------------------------------------------------------
# Pure-JAX reference (mirrors the torch module, including -inf mask)
# ---------------------------------------------------------------------------
def _reference(embeddings, w_q, w_k, w_v, *, mask=False, diagnol=1):
    q = jnp.matmul(embeddings, w_q)
    k = jnp.matmul(embeddings, w_k)
    v = jnp.matmul(embeddings, w_v)
    sim = jnp.matmul(q, jnp.swapaxes(k, 1, 2)) / math.sqrt(w_q.shape[1])
    if mask:
        s = q.shape[1]
        rows = jax.lax.broadcasted_iota(jnp.int32, (s, s), 0)
        cols = jax.lax.broadcasted_iota(jnp.int32, (s, s), 1)
        sim = jnp.where(cols - rows >= diagnol, -jnp.inf, sim)
    weights = jax.nn.softmax(sim, axis=-1)
    return jnp.matmul(weights, v)


if __name__ == "__main__":
    key = jax.random.PRNGKey(0)
    B, S, d_input = 2, 8, 32
    d_k = d_input   # module defaults: d_k = d_v = d_input
    d_v = d_input

    k1, k2, k3, k4 = jax.random.split(key, 4)
    embeddings = jax.random.normal(k1, (B, S, d_input), dtype=jnp.float32)
    W_q = jax.random.normal(k2, (d_input, d_k), dtype=jnp.float32)
    W_k = jax.random.normal(k3, (d_input, d_k), dtype=jnp.float32)
    W_v = jax.random.normal(k4, (d_input, d_v), dtype=jnp.float32)

    # Pack the QKV weight once (hoisted out of the per-forward hot path).
    w_qkv = jax.block_until_ready(
        pack_qkv_weights(W_q, W_k, W_v, dtype=embeddings.dtype))

    # Unmasked (mask=None default of the module).
    out = jax.block_until_ready(
        self_attention_packed(embeddings, w_qkv, d_k=d_k, d_v=d_v, mask=False))
    ref = _reference(embeddings, W_q, W_k, W_v, mask=False)
    assert out.shape == (B, S, d_v)
    assert jnp.allclose(out, ref, atol=1e-2, rtol=1e-2), "mismatch (no mask)"

    # Masked path (torch.triu(-inf, diagonal=1) semantics).
    out_m = jax.block_until_ready(
        self_attention_packed(embeddings, w_qkv, d_k=d_k, d_v=d_v,
                              mask=True, diagnol=1))
    ref_m = _reference(embeddings, W_q, W_k, W_v, mask=True, diagnol=1)
    assert jnp.allclose(out_m, ref_m, atol=1e-2, rtol=1e-2), "mismatch (mask)"

    print("KERNEL_OK")
</pallas_src>

<mosaic_0001>
module attributes {stable_mosaic.version = 11 : i64} {
  func.func @_self_attention_kernel(%arg0: i32, %arg1: memref<2x8x32xf32, #tpu.memory_space<vmem>>, %arg2: memref<32x384xf32, #tpu.memory_space<vmem>>, %arg3: memref<2x8x32xf32, #tpu.memory_space<vmem>>) attributes {dimension_semantics = [#tpu.dimension_semantics<parallel>], iteration_bounds = array<i64: 1>, scalar_prefetch = 0 : i64, scratch_operands = 0 : i64, tpu.core_type = #tpu.core_type<tc>, window_params = [{transform_indices = @transform_0, window_bounds = array<i64: 2, 8, 32>}, {pipeline_mode = #tpu.pipeline_mode<synchronous>, transform_indices = @transform_1, window_bounds = array<i64: 32, 384>}, {transform_indices = @transform_2, window_bounds = array<i64: 2, 8, 32>}]} {
    %c0 = arith.constant 0 : index
    %c0_0 = arith.constant 0 : index
    %c0_1 = arith.constant 0 : index
    %0 = vector.load %arg1[%c0, %c0_0, %c0_1] : memref<2x8x32xf32, #tpu.memory_space<vmem>>, vector<2x8x32xf32>
    %c0_2 = arith.constant 0 : index
    %c0_3 = arith.constant 0 : index
    %1 = vector.load %arg2[%c0_2, %c0_3] : memref<32x384xf32, #tpu.memory_space<vmem>>, vector<32x384xf32>
    %2 = vector.shape_cast %0 : vector<2x8x32xf32> to vector<16x32xf32>
    %cst = arith.constant dense<0.000000e+00> : vector<16x384xf32>
    %3 = tpu.matmul %2, %1, %cst {dimension_numbers = #tpu.dot_dimension_numbers<[1], [0], [0], [1], [0, 0, 1, 1], [], []>} : vector<16x32xf32>, vector<32x384xf32>, vector<16x384xf32> -> vector<16x384xf32>
    %4 = vector.shape_cast %3 : vector<16x384xf32> to vector<2x8x384xf32>
    %5 = vector.extract_strided_slice %4 {offsets = [0, 0, 0], sizes = [2, 8, 128], strides = [1, 1, 1]} : vector<2x8x384xf32> to vector<2x8x128xf32>
    %cst_4 = arith.constant 0.176776692 : f32
    %6 = vector.broadcast %cst_4 : f32 to vector<2x8x128xf32>
    %7 = arith.mulf %5, %6 : vector<2x8x128xf32>
    %8 = vector.extract_strided_slice %4 {offsets = [0, 0, 128], sizes = [2, 8, 128], strides = [1, 1, 1]} : vector<2x8x384xf32> to vector<2x8x128xf32>
    %9 = vector.extract_strided_slice %4 {offsets = [0, 0, 256], sizes = [2, 8, 128], strides = [1, 1, 1]} : vector<2x8x384xf32> to vector<2x8x128xf32>
    "tpu.trace_start"() <{level = 10 : i32, message = "bqd,bkd->bqk"}> : () -> ()
    %cst_5 = arith.constant dense<0.000000e+00> : vector<2x8x8xf32>
    %10 = tpu.matmul %7, %8, %cst_5 {dimension_numbers = #tpu.dot_dimension_numbers<[2], [2], [1], [1], [0, 0, 0, 1, 1, 1], [0], [0]>} : vector<2x8x128xf32>, vector<2x8x128xf32>, vector<2x8x8xf32> -> vector<2x8x8xf32>
    "tpu.trace_stop"() : () -> ()
    %cst_6 = arith.constant dense<0xFF800000> : vector<2x8xf32>
    %11 = vector.multi_reduction <maximumf>, %10, %cst_6 [2] : vector<2x8x8xf32> to vector<2x8xf32>
    %12 = vector.shape_cast %11 : vector<2x8xf32> to vector<2x8x1xf32>
    %13 = vector.broadcast %12 : vector<2x8x1xf32> to vector<2x8x8xf32>
    %14 = arith.subf %10, %13 : vector<2x8x8xf32>
    %15 = math.exp %14 : vector<2x8x8xf32>
    %cst_7 = arith.constant dense<0.000000e+00> : vector<2x8xf32>
    %16 = vector.multi_reduction <add>, %15, %cst_7 [2] : vector<2x8x8xf32> to vector<2x8xf32>
    %17 = vector.shape_cast %16 : vector<2x8xf32> to vector<2x8x1xf32>
    "tpu.trace_start"() <{level = 10 : i32, message = "bqk,bkd->bqd"}> : () -> ()
    %cst_8 = arith.constant dense<0.000000e+00> : vector<2x8x128xf32>
    %18 = tpu.matmul %15, %9, %cst_8 {dimension_numbers = #tpu.dot_dimension_numbers<[2], [1], [1], [2], [0, 0, 0, 1, 1, 2], [0], [0]>} : vector<2x8x8xf32>, vector<2x8x128xf32>, vector<2x8x128xf32> -> vector<2x8x128xf32>
    "tpu.trace_stop"() : () -> ()
    %19 = vector.broadcast %17 : vector<2x8x1xf32> to vector<2x8x128xf32>
    %20 = arith.divf %18, %19 : vector<2x8x128xf32>
    %21 = vector.extract_strided_slice %20 {offsets = [0, 0, 0], sizes = [2, 8, 32], strides = [1, 1, 1]} : vector<2x8x128xf32> to vector<2x8x32xf32>
    %c0_9 = arith.constant 0 : index
    %c0_10 = arith.constant 0 : index
    %c0_11 = arith.constant 0 : index
    %22 = vector.load %arg3[%c0_9, %c0_10, %c0_11] : memref<2x8x32xf32, #tpu.memory_space<vmem>>, vector<2x8x32xf32>
    tpu.vector_store %arg3[%c0_9, %c0_10, %c0_11], %21 {strides = array<i32>} : memref<2x8x32xf32, #tpu.memory_space<vmem>>, vector<2x8x32xf32>,
    return
  }
  func.func @transform_0(%arg0: i32) -> (i32, i32, i32) {
    %c0_i32 = arith.constant 0 : i32
    %c0_i32_0 = arith.constant 0 : i32
    %c0_i32_1 = arith.constant 0 : i32
    return %arg0, %c0_i32, %c0_i32_0 : i32, i32, i32
  }
  func.func @transform_1(%arg0: i32) -> (i32, i32) {
    %c0_i32 = arith.constant 0 : i32
    %c0_i32_0 = arith.constant 0 : i32
    %c0_i32_1 = arith.constant 0 : i32
    return %c0_i32, %c0_i32_0 : i32, i32
  }
  func.func @transform_2(%arg0: i32) -> (i32, i32, i32) {
    %c0_i32 = arith.constant 0 : i32
    %c0_i32_0 = arith.constant 0 : i32
    %c0_i32_1 = arith.constant 0 : i32
    return %arg0, %c0_i32, %c0_i32_0 : i32, i32, i32
  }
}

module attributes {stable_mosaic.version = 11 : i64} {
  func.func @_self_attention_kernel(%arg0: i32, %arg1: memref<2x8x32xf32, #tpu.memory_space<vmem>>, %arg2: memref<32x384xf32, #tpu.memory_space<vmem>>, %arg3: memref<2x8x32xf32, #tpu.memory_space<vmem>>) attributes {dimension_semantics = [#tpu.dimension_semantics<parallel>], iteration_bounds = array<i64: 1>, scalar_prefetch = 0 : i64, scratch_operands = 0 : i64, tpu.core_type = #tpu.core_type<tc>, window_params = [{transform_indices = @transform_0, window_bounds = array<i64: 2, 8, 32>}, {pipeline_mode = #tpu.pipeline_mode<synchronous>, transform_indices = @transform_1, window_bounds = array<i64: 32, 384>}, {transform_indices = @transform_2, window_bounds = array<i64: 2, 8, 32>}]} {
    %c0 = arith.constant 0 : index
    %c0_0 = arith.constant 0 : index
    %c0_1 = arith.constant 0 : index
    %0 = vector.load %arg1[%c0, %c0_0, %c0_1] : memref<2x8x32xf32, #tpu.memory_space<vmem>>, vector<2x8x32xf32>
    %c0_2 = arith.constant 0 : index
    %c0_3 = arith.constant 0 : index
    %1 = vector.load %arg2[%c0_2, %c0_3] : memref<32x384xf32, #tpu.memory_space<vmem>>, vector<32x384xf32>
    %2 = vector.shape_cast %0 : vector<2x8x32xf32> to vector<16x32xf32>
    %cst = arith.constant dense<0.000000e+00> : vector<16x384xf32>
    %3 = tpu.matmul %2, %1, %cst {dimension_numbers = #tpu.dot_dimension_numbers<[1], [0], [0], [1], [0, 0, 1, 1], [], []>} : vector<16x32xf32>, vector<32x384xf32>, vector<16x384xf32> -> vector<16x384xf32>
    %4 = vector.shape_cast %3 : vector<16x384xf32> to vector<2x8x384xf32>
    %5 = vector.extract_strided_slice %4 {offsets = [0, 0, 0], sizes = [2, 8, 128], strides = [1, 1, 1]} : vector<2x8x384xf32> to vector<2x8x128xf32>
    %cst_4 = arith.constant 0.176776692 : f32
    %6 = vector.broadcast %cst_4 : f32 to vector<2x8x128xf32>
    %7 = arith.mulf %5, %6 : vector<2x8x128xf32>
    %8 = vector.extract_strided_slice %4 {offsets = [0, 0, 128], sizes = [2, 8, 128], strides = [1, 1, 1]} : vector<2x8x384xf32> to vector<2x8x128xf32>
    %9 = vector.extract_strided_slice %4 {offsets = [0, 0, 256], sizes = [2, 8, 128], strides = [1, 1, 1]} : vector<2x8x384xf32> to vector<2x8x128xf32>
    "tpu.trace_start"() <{level = 10 : i32, message = "bqd,bkd->bqk"}> : () -> ()
    %cst_5 = arith.constant dense<0.000000e+00> : vector<2x8x8xf32>
    %10 = tpu.matmul %7, %8, %cst_5 {dimension_numbers = #tpu.dot_dimension_numbers<[2], [2], [1], [1], [0, 0, 0, 1, 1, 1], [0], [0]>} : vector<2x8x128xf32>, vector<2x8x128xf32>, vector<2x8x8xf32> -> vector<2x8x8xf32>
    "tpu.trace_stop"() : () -> ()
    %cst_6 = arith.constant dense<0xFF800000> : vector<2x8xf32>
    %11 = vector.multi_reduction <maximumf>, %10, %cst_6 [2] : vector<2x8x8xf32> to vector<2x8xf32>
    %12 = vector.shape_cast %11 : vector<2x8xf32> to vector<2x8x1xf32>
    %13 = vector.broadcast %12 : vector<2x8x1xf32> to vector<2x8x8xf32>
    %14 = arith.subf %10, %13 : vector<2x8x8xf32>
    %15 = math.exp %14 : vector<2x8x8xf32>
    %cst_7 = arith.constant dense<0.000000e+00> : vector<2x8xf32>
    %16 = vector.multi_reduction <add>, %15, %cst_7 [2] : vector<2x8x8xf32> to vector<2x8xf32>
    %17 = vector.shape_cast %16 : vector<2x8xf32> to vector<2x8x1xf32>
    "tpu.trace_start"() <{level = 10 : i32, message = "bqk,bkd->bqd"}> : () -> ()
    %cst_8 = arith.constant dense<0.000000e+00> : vector<2x8x128xf32>
    %18 = tpu.matmul %15, %9, %cst_8 {dimension_numbers = #tpu.dot_dimension_numbers<[2], [1], [1], [2], [0, 0, 0, 1, 1, 2], [0], [0]>} : vector<2x8x8xf32>, vector<2x8x128xf32>, vector<2x8x128xf32> -> vector<2x8x128xf32>
    "tpu.trace_stop"() : () -> ()
    %19 = vector.broadcast %17 : vector<2x8x1xf32> to vector<2x8x128xf32>
    %20 = arith.divf %18, %19 : vector<2x8x128xf32>
    %21 = vector.extract_strided_slice %20 {offsets = [0, 0, 0], sizes = [2, 8, 32], strides = [1, 1, 1]} : vector<2x8x128xf32> to vector<2x8x32xf32>
    %c0_9 = arith.constant 0 : index
    %c0_10 = arith.constant 0 : index
    %c0_11 = arith.constant 0 : index
    %22 = vector.load %arg3[%c0_9, %c0_10, %c0_11] : memref<2x8x32xf32, #tpu.memory_space<vmem>>, vector<2x8x32xf32>
    tpu.vector_store %arg3[%c0_9, %c0_10, %c0_11], %21 {strides = array<i32>} : memref<2x8x32xf32, #tpu.memory_space<vmem>>, vector<2x8x32xf32>,
    return
  }
  func.func @transform_0(%arg0: i32) -> (i32, i32, i32) {
    %c0_i32 = arith.constant 0 : i32
    %c0_i32_0 = arith.constant 0 : i32
    %c0_i32_1 = arith.constant 0 : i32
    return %arg0, %c0_i32, %c0_i32_0 : i32, i32, i32
  }
  func.func @transform_1(%arg0: i32) -> (i32, i32) {
    %c0_i32 = arith.constant 0 : i32
    %c0_i32_0 = arith.constant 0 : i32
    %c0_i32_1 = arith.constant 0 : i32
    return %c0_i32, %c0_i32_0 : i32, i32
  }
  func.func @transform_2(%arg0: i32) -> (i32, i32, i32) {
    %c0_i32 = arith.constant 0 : i32
    %c0_i32_0 = arith.constant 0 : i32
    %c0_i32_1 = arith.constant 0 : i32
    return %arg0, %c0_i32, %c0_i32_0 : i32, i32, i32
  }
}

</mosaic_0001>

<llo_original>
// kernel: tpu_custom_call.1
$region0: #{tpu_custom_call.1}
  #allocation0 [shape = 'u32[]', space=smem, size = 0x4, offset = 0x4, fixed_abs, tag = 'smem constant byte address 0x4 - core index']
  #allocation1 [shape = 'u32[72,128]{1,0:T(1,128)}', space=vmem, size = 0x9000, scoped, tag = 'internal scratch']
  %s0 = inlined_call_operand.hbm [shape: f32[2,8,32], index: 0, kind: input, shape index: {}]
  %s1 = inlined_call_operand.hbm [shape: f32[32,384], index: 1, kind: input, shape index: {}]
  %s2 = inlined_call_operand.hbm [shape: f32[2,8,32], index: 2, kind: output, shape index: {}]
  %s3 = sld [smem:[#allocation0]]
  $region26: #{tpu_custom_call.1} parent=0
    _
  %s5 = ssub.s32 1, %s3
  %s6 = scalar_select 0, %s5, %s3
  $region1: #{tpu_custom_call.1} parent=0
    #allocation2 [shape = 'u8[8192]{0}', space=vmem, size = 0x2000, scoped, tag = 'input window, operand 0, single buffered']
    #allocation3 [shape = 's32[1]{0}', space=sflag, size = 0x4, scoped, tag = 'scoped memory for tpu_custom_call.1']
    #allocation4 [shape = 's32[1]{0}', space=sflag, size = 0x4, scoped, tag = 'scoped memory for tpu_custom_call.1']
    #allocation5 [shape = 'u8[49152]{0}', space=vmem, size = 0xc000, scoped, tag = 'input window, operand 1, single buffered']
    #allocation6 [shape = 's32[1]{0}', space=sflag, size = 0x4, scoped, tag = 'scoped memory for tpu_custom_call.1']
    #allocation7 [shape = 'u8[8192]{0}', space=vmem, size = 0x2000, scoped, tag = 'output window, operand 0, single buffered']
    %7 = vsyncpa [#allocation3], 0
    %8 = vsyncpa [#allocation6], 0
    %9 = vsyncpa [#allocation4], 0
    // Predicated region
    $region2: #{tpu_custom_call.1} parent=1 // pred_check
      _
    $region3: #{tpu_custom_call.1} parent=1 // pred_check_branch
      %11 = sbr.rel (0) target = $region5
    $region4: #{tpu_custom_call.1} parent=1 // pred_region
      %13 = vsyncadd [#allocation3], 0
      %s14 = sshll.u32 %s0, 4
      %s15 = int_to_ptr.hbm [resolvable:$true] %s14
      %s16 = sshll.u32 [#allocation2], 4
      %s17 = int_to_ptr.vmem [resolvable:$true] %s16
      %22 = dma.hbm_to_vmem [thread:$0]  %s15, 256, %s17, [#allocation3], 128, 128, 8
    $region5: #{tpu_custom_call.1} parent=1 // pred_fallthru
      _
    // Predicated region
    $region6: #{tpu_custom_call.1} parent=1 // pred_check
      _
    $region7: #{tpu_custom_call.1} parent=1 // pred_check_branch
      %24 = sbr.rel (0) target = $region9
    $region8: #{tpu_custom_call.1} parent=1 // pred_region
      %26 = vsyncadd [#allocation6], 0
      %s27 = sshll.u32 %s1, 4
      %s28 = int_to_ptr.hbm [resolvable:$true] %s27
      %s29 = sshll.u32 [#allocation5], 4
      %s30 = int_to_ptr.vmem [resolvable:$true] %s29
      %35 = dma.hbm_to_vmem [thread:$0]  %s28, 1536, %s30, [#allocation6], 384, 384, 24
    $region9: #{tpu_custom_call.1} parent=1 // pred_fallthru
      _
    // Predicated region
    $region10: #{tpu_custom_call.1} parent=1 // pred_check
      _
    $region11: #{tpu_custom_call.1} parent=1 // pred_check_branch
      %37 = sbr.rel (0) target = $region13
    $region12: #{tpu_custom_call.1} parent=1 // pred_region
      %39 = dma.done [#allocation3], 256
    $region13: #{tpu_custom_call.1} parent=1 // pred_fallthru
      _
    // Predicated region
    $region14: #{tpu_custom_call.1} parent=1 // pred_check
      _
    $region15: #{tpu_custom_call.1} parent=1 // pred_check_branch
      %41 = sbr.rel (0) target = $region17
    $region16: #{tpu_custom_call.1} parent=1 // pred_region
      %43 = dma.done [#allocation6], 1536
    $region17: #{tpu_custom_call.1} parent=1 // pred_fallthru
      _
    %v44 = vld [vmem:[#allocation2] sm:$0xff]
    %v45 = vld [vmem:[#allocation2 + $0x8] sm:$0xff]
    %v46 = vld [vmem:[#allocation5] sm:$0xff]
    %v47 = vld [vmem:[#allocation5 + $0x8] sm:$0xff]
    %v48 = vld [vmem:[#allocation5 + $0x10] sm:$0xff]
    %v49 = vld [vmem:[#allocation5 + $0x18] sm:$0xff]
    %v50 = vld [vmem:[#allocation5 + $0x20] sm:$0xff]
    %v51 = vld [vmem:[#allocation5 + $0x28] sm:$0xff]
    %v52 = vld [vmem:[#allocation5 + $0x30] sm:$0xff]
    %v53 = vld [vmem:[#allocation5 + $0x38] sm:$0xff]
    %v54 = vld [vmem:[#allocation5 + $0x40] sm:$0xff]
    %v55 = vld [vmem:[#allocation5 + $0x48] sm:$0xff]
    %v56 = vld [vmem:[#allocation5 + $0x50] sm:$0xff]
    %v57 = vld [vmem:[#allocation5 + $0x58] sm:$0xff]
    %vm58 = vcmask 261120
    %v60 = vsel %vm58, %v44, 0
    %v63 = vsel %vm58, %v45, 0
    %65 = vmatpush.msra.mxu0 0.0
    %66 = vmatpush.msra.mxu0 0.0
    %67 = vmatpush.msra.mxu0 0.0
    %68 = vmatpush.msra.mxu0 0.0
    %69 = vmatpush.msra.mxu0 0.0
    %70 = vmatpush.msra.mxu0 0.0
    %71 = vmatpush.msra.mxu0 0.0
    %72 = vmatpush.msra.mxu0 0.0
    %73 = vmatpush.msra.mxu0 0.0
    %74 = vmatpush.msra.mxu0 0.0
    %75 = vmatpush.msra.mxu0 0.0
    %76 = vmatpush.msra.mxu0 0.0
    %77 = vmatpush.msra.mxu0 %v55
    %78 = vmatpush.msra.mxu0 %v52
    %79 = vmatpush.msra.mxu0 %v49
    %80 = vmatpush.msra.mxu0 %v46
    %81 = vmatmul.f32.gmra.mxu0 %v60
    %v82 = vpop.f32.mrf.mxu0
    %v83 = vadd.f32 0.0, %v82
    %84 = vmatmul.f32.gmra.mxu0 %v63
    %v85 = vpop.f32.mrf.mxu0
    %v86 = vadd.f32 0.0, %v85
    %87 = vdwg.mxu0
    %88 = vmatpush.msra.mxu0 0.0
    %89 = vmatpush.msra.mxu0 0.0
    %90 = vmatpush.msra.mxu0 0.0
    %91 = vmatpush.msra.mxu0 0.0
    %92 = vmatpush.msra.mxu0 0.0
    %93 = vmatpush.msra.mxu0 0.0
    %94 = vmatpush.msra.mxu0 0.0
    %95 = vmatpush.msra.mxu0 0.0
    %96 = vmatpush.msra.mxu0 0.0
    %97 = vmatpush.msra.mxu0 0.0
    %98 = vmatpush.msra.mxu0 0.0
    %99 = vmatpush.msra.mxu0 0.0
    %100 = vmatpush.msra.mxu0 %v56
    %101 = vmatpush.msra.mxu0 %v53
    %102 = vmatpush.msra.mxu0 %v50
    %103 = vmatpush.msra.mxu0 %v47
    %104 = vmatmul.f32.gmra.mxu0 %v60
    %v105 = vpop.f32.mrf.mxu0
    %v106 = vadd.f32 0.0, %v105
    %107 = vmatmul.f32.gmra.mxu0 %v63
    %v108 = vpop.f32.mrf.mxu0
    %v109 = vadd.f32 0.0, %v108
    %110 = vdwg.mxu0
    %111 = vmatpush.msra.mxu0 0.0
    %112 = vmatpush.msra.mxu0 0.0
    %113 = vmatpush.msra.mxu0 0.0
    %114 = vmatpush.msra.mxu0 0.0
    %115 = vmatpush.msra.mxu0 0.0
    %116 = vmatpush.msra.mxu0 0.0
    %117 = vmatpush.msra.mxu0 0.0
    %118 = vmatpush.msra.mxu0 0.0
    %119 = vmatpush.msra.mxu0 0.0
    %120 = vmatpush.msra.mxu0 0.0
    %121 = vmatpush.msra.mxu0 0.0
    %122 = vmatpush.msra.mxu0 0.0
    %123 = vmatpush.msra.mxu0 %v57
    %124 = vmatpush.msra.mxu0 %v54
    %125 = vmatpush.msra.mxu0 %v51
    %126 = vmatpush.msra.mxu0 %v48
    %127 = vmatmul.f32.gmra.mxu0 %v60
    %v128 = vpop.f32.mrf.mxu0
    %v129 = vadd.f32 0.0, %v128
    %130 = vmatmul.f32.gmra.mxu0 %v63
    %v131 = vpop.f32.mrf.mxu0
    %v132 = vadd.f32 0.0, %v131
    %133 = vdwg.mxu0
    %v134 = vmul.f32 %v83, 0.17677669
    %v135 = vmul.f32 %v86, 0.17677669
    %136 = vmatpush.xpose.msra.mxu0 0.0
    %137 = vmatpush.xpose.msra.mxu0 0.0
    %138 = vmatpush.xpose.msra.mxu0 0.0
    %139 = vmatpush.xpose.msra.mxu0 0.0
    %140 = vmatpush.xpose.msra.mxu0 0.0
    %141 = vmatpush.xpose.msra.mxu0 0.0
    %142 = vmatpush.xpose.msra.mxu0 0.0
    %143 = vmatpush.xpose.msra.mxu0 0.0
    %144 = vmatpush.xpose.msra.mxu0 0.0
    %145 = vmatpush.xpose.msra.mxu0 0.0
    %146 = vmatpush.xpose.msra.mxu0 0.0
    %147 = vmatpush.xpose.msra.mxu0 0.0
    %148 = vmatpush.xpose.msra.mxu0 0.0
    %149 = vmatpush.xpose.msra.mxu0 0.0
    %150 = vmatpush.xpose.msra.mxu0 0.0
    %151 = vmatpush.xpose.msra.mxu0 %v106
    %152 = vmatmul.f32.gmra.mxu0 %v134
    %v153 = vpop.f32.mrf.mxu0
    %v154 = vadd.f32 0.0, %v153
    %155 = vdwg.mxu0
    %156 = vmatpush.xpose.msra.mxu0 0.0
    %157 = vmatpush.xpose.msra.mxu0 0.0
    %158 = vmatpush.xpose.msra.mxu0 0.0
    %159 = vmatpush.xpose.msra.mxu0 0.0
    %160 = vmatpush.xpose.msra.mxu0 0.0
    %161 = vmatpush.xpose.msra.mxu0 0.0
    %162 = vmatpush.xpose.msra.mxu0 0.0
    %163 = vmatpush.xpose.msra.mxu0 0.0
    %164 = vmatpush.xpose.msra.mxu0 0.0
    %165 = vmatpush.xpose.msra.mxu0 0.0
    %166 = vmatpush.xpose.msra.mxu0 0.0
    %167 = vmatpush.xpose.msra.mxu0 0.0
    %168 = vmatpush.xpose.msra.mxu0 0.0
    %169 = vmatpush.xpose.msra.mxu0 0.0
    %170 = vmatpush.xpose.msra.mxu0 0.0
    %171 = vmatpush.xpose.msra.mxu0 %v109
    %172 = vmatmul.f32.gmra.mxu0 %v135
    %v173 = vpop.f32.mrf.mxu0
    %v174 = vadd.f32 0.0, %v173
    %175 = vdwg.mxu0
    %vm176 = vcmask 64512
    %v177 = vsel %vm176, %v154, -inf
    %178 = vmax.xlane.f32.xlu0 %v177
    %v179 = vpop.xlane.xlu0 %178
    %v180 = vsel %vm176, %v174, -inf
    %181 = vmax.xlane.f32.xlu0 %v180
    %v182 = vpop.xlane.xlu0 %181
    %v183 = vsub.f32 %v154, %v179
    %v184 = vsub.f32 %v174, %v182
    %v185 = vmul.f32 %v183, 1.442695
    %v186 = vpow.pop %v185
    %v187 = vmul.f32 %v184, 1.442695
    %v188 = vpow.pop %v187
    %v189 = vsel %vm176, %v186, 0.0
    %190 = vadd.xlane.f32.xlu0 %v189
    %v191 = vpop.xlane.xlu0 %190
    %v192 = vsel %vm176, %v188, 0.0
    %193 = vadd.xlane.f32.xlu0 %v192
    %v194 = vpop.xlane.xlu0 %193
    %v196 = vsel %vm176, %v186, 0
    %198 = vmatpush.msra.mxu0 0.0
    %199 = vmatpush.msra.mxu0 0.0
    %200 = vmatpush.msra.mxu0 0.0
    %201 = vmatpush.msra.mxu0 0.0
    %202 = vmatpush.msra.mxu0 0.0
    %203 = vmatpush.msra.mxu0 0.0
    %204 = vmatpush.msra.mxu0 0.0
    %205 = vmatpush.msra.mxu0 0.0
    %206 = vmatpush.msra.mxu0 0.0
    %207 = vmatpush.msra.mxu0 0.0
    %208 = vmatpush.msra.mxu0 0.0
    %209 = vmatpush.msra.mxu0 0.0
    %210 = vmatpush.msra.mxu0 0.0
    %211 = vmatpush.msra.mxu0 0.0
    %212 = vmatpush.msra.mxu0 0.0
    %213 = vmatpush.msra.mxu0 %v129
    %214 = vmatmul.f32.gmra.mxu0 %v196
    %v215 = vpop.f32.mrf.mxu0
    %v216 = vadd.f32 0.0, %v215
    %217 = vdwg.mxu0
    %v219 = vsel %vm176, %v188, 0
    %221 = vmatpush.msra.mxu0 0.0
    %222 = vmatpush.msra.mxu0 0.0
    %223 = vmatpush.msra.mxu0 0.0
    %224 = vmatpush.msra.mxu0 0.0
    %225 = vmatpush.msra.mxu0 0.0
    %226 = vmatpush.msra.mxu0 0.0
    %227 = vmatpush.msra.mxu0 0.0
    %228 = vmatpush.msra.mxu0 0.0
    %229 = vmatpush.msra.mxu0 0.0
    %230 = vmatpush.msra.mxu0 0.0
    %231 = vmatpush.msra.mxu0 0.0
    %232 = vmatpush.msra.mxu0 0.0
    %233 = vmatpush.msra.mxu0 0.0
    %234 = vmatpush.msra.mxu0 0.0
    %235 = vmatpush.msra.mxu0 0.0
    %236 = vmatpush.msra.mxu0 %v132
    %237 = vmatmul.f32.gmra.mxu0 %v219
    %v238 = vpop.f32.mrf.mxu0
    %v239 = vadd.f32 0.0, %v238
    %240 = vdwg.mxu0
    %v241 = vrcp.pop %v191
    %v242 = vmul.f32 %v191, %v241
    %v243 = vsub.f32 1.0, %v242
    %v244 = vmul.f32 %v241, %v243
    %v245 = vadd.f32 %v241, %v244
    %vm246 = vweird.f32 %v191
    %vm247 = vweird.f32 %v241
    %vm248 = vmor %vm246, %vm247
    %v249 = vsel %vm248, %v241, %v245
    %v250 = vand.u32 2147483647, %v191
    %vm251 = vcmp.eq.f32.partialorder %v250, 8.507059e+37
    %v252 = vand.u32 %v191, 2147483648
    %v253 = vor.u32 1.1754944e-38, %v252
    %v254 = vsel %vm251, %v253, %v249
    %v255 = vmul.f32 %v216, %v254
    %v256 = vrcp.pop %v194
    %v257 = vmul.f32 %v194, %v256
    %v258 = vsub.f32 1.0, %v257
    %v259 = vmul.f32 %v256, %v258
    %v260 = vadd.f32 %v256, %v259
    %vm261 = vweird.f32 %v194
    %vm262 = vweird.f32 %v256
    %vm263 = vmor %vm261, %vm262
    %v264 = vsel %vm263, %v256, %v260
    %v265 = vand.u32 2147483647, %v194
    %vm266 = vcmp.eq.f32.partialorder %v265, 8.507059e+37
    %v267 = vand.u32 %v194, 2147483648
    %v268 = vor.u32 1.1754944e-38, %v267
    %v269 = vsel %vm266, %v268, %v264
    %v270 = vmul.f32 %v239, %v269
    %271 = vst.msk [vmem:[#allocation7] sm:$0xff] %vm58, %v255
    %272 = vst.msk [vmem:[#allocation7 + $0x8] sm:$0xff] %vm58, %v270
    // Predicated region
    $region18: #{tpu_custom_call.1} parent=1 // pred_check
      _
    $region19: #{tpu_custom_call.1} parent=1 // pred_check_branch
      %274 = sbr.rel (0) target = $region21
    $region20: #{tpu_custom_call.1} parent=1 // pred_region
      %276 = vsyncadd [#allocation4], 0
      %s277 = sshll.u32 [#allocation7], 4
      %s278 = int_to_ptr.vmem [resolvable:$true] %s277
      %s279 = sshll.u32 %s2, 4
      %s280 = int_to_ptr.hbm [resolvable:$true] %s279
      %285 = dma.vmem_to_hbm [thread:$0]  %s278, 256, %s280, [#allocation4], 128, 128, 8
    $region21: #{tpu_custom_call.1} parent=1 // pred_fallthru
      _
    // Predicated region
    $region22: #{tpu_custom_call.1} parent=1 // pred_check
      _
    $region23: #{tpu_custom_call.1} parent=1 // pred_check_branch
      %287 = sbr.rel (0) target = $region25
    $region24: #{tpu_custom_call.1} parent=1 // pred_region
      %289 = dma.done [#allocation4], 256
    $region25: #{tpu_custom_call.1} parent=1 // pred_fallthru
      _
    %290 = vsyncpa [#allocation3], 1
    %291 = vsyncpa [#allocation6], 1
    %292 = vsyncpa [#allocation4], 1

// kernel: tpu_custom_call.1
$region0: #{tpu_custom_call.1}
  #allocation0 [shape = 'u32[]', space=smem, size = 0x4, offset = 0x4, fixed_abs, tag = 'smem constant byte address 0x4 - core index']
  #allocation1 [shape = 'u32[72,128]{1,0:T(1,128)}', space=vmem, size = 0x9000, scoped, tag = 'internal scratch']
  %s0 = inlined_call_operand.hbm [shape: f32[2,8,32], index: 0, kind: input, shape index: {}]
  %s1 = inlined_call_operand.hbm [shape: f32[32,384], index: 1, kind: input, shape index: {}]
  %s2 = inlined_call_operand.hbm [shape: f32[2,8,32], index: 2, kind: output, shape index: {}]
  %s3 = sld [smem:[#allocation0]]
  $region26: #{tpu_custom_call.1} parent=0
    _
  %s5 = ssub.s32 1, %s3
  %s6 = scalar_select 0, %s5, %s3
  $region1: #{tpu_custom_call.1} parent=0
    #allocation2 [shape = 'u8[8192]{0}', space=vmem, size = 0x2000, scoped, tag = 'input window, operand 0, single buffered']
    #allocation3 [shape = 's32[1]{0}', space=sflag, size = 0x4, scoped, tag = 'scoped memory for tpu_custom_call.1']
    #allocation4 [shape = 's32[1]{0}', space=sflag, size = 0x4, scoped, tag = 'scoped memory for tpu_custom_call.1']
    #allocation5 [shape = 'u8[49152]{0}', space=vmem, size = 0xc000, scoped, tag = 'input window, operand 1, single buffered']
    #allocation6 [shape = 's32[1]{0}', space=sflag, size = 0x4, scoped, tag = 'scoped memory for tpu_custom_call.1']
    #allocation7 [shape = 'u8[8192]{0}', space=vmem, size = 0x2000, scoped, tag = 'output window, operand 0, single buffered']
    %7 = vsyncpa [#allocation3], 0
    %8 = vsyncpa [#allocation6], 0
    %9 = vsyncpa [#allocation4], 0
    // Predicated region
    $region2: #{tpu_custom_call.1} parent=1 // pred_check
      _
    $region3: #{tpu_custom_call.1} parent=1 // pred_check_branch
      %11 = sbr.rel (0) target = $region5
    $region4: #{tpu_custom_call.1} parent=1 // pred_region
      %13 = vsyncadd [#allocation3], 0
      %s14 = sshll.u32 %s0, 4
      %s15 = int_to_ptr.hbm [resolvable:$true] %s14
      %s16 = sshll.u32 [#allocation2], 4
      %s17 = int_to_ptr.vmem [resolvable:$true] %s16
      %22 = dma.hbm_to_vmem [thread:$0]  %s15, 256, %s17, [#allocation3], 128, 128, 8
    $region5: #{tpu_custom_call.1} parent=1 // pred_fallthru
      _
    // Predicated region
    $region6: #{tpu_custom_call.1} parent=1 // pred_check
      _
    $region7: #{tpu_custom_call.1} parent=1 // pred_check_branch
      %24 = sbr.rel (0) target = $region9
    $region8: #{tpu_custom_call.1} parent=1 // pred_region
      %26 = vsyncadd [#allocation6], 0
      %s27 = sshll.u32 %s1, 4
      %s28 = int_to_ptr.hbm [resolvable:$true] %s27
      %s29 = sshll.u32 [#allocation5], 4
      %s30 = int_to_ptr.vmem [resolvable:$true] %s29
      %35 = dma.hbm_to_vmem [thread:$0]  %s28, 1536, %s30, [#allocation6], 384, 384, 24
    $region9: #{tpu_custom_call.1} parent=1 // pred_fallthru
      _
    // Predicated region
    $region10: #{tpu_custom_call.1} parent=1 // pred_check
      _
    $region11: #{tpu_custom_call.1} parent=1 // pred_check_branch
      %37 = sbr.rel (0) target = $region13
    $region12: #{tpu_custom_call.1} parent=1 // pred_region
      %39 = dma.done [#allocation3], 256
    $region13: #{tpu_custom_call.1} parent=1 // pred_fallthru
      _
    // Predicated region
    $region14: #{tpu_custom_call.1} parent=1 // pred_check
      _
    $region15: #{tpu_custom_call.1} parent=1 // pred_check_branch
      %41 = sbr.rel (0) target = $region17
    $region16: #{tpu_custom_call.1} parent=1 // pred_region
      %43 = dma.done [#allocation6], 1536
    $region17: #{tpu_custom_call.1} parent=1 // pred_fallthru
      _
    %v44 = vld [vmem:[#allocation2] sm:$0xff]
    %v45 = vld [vmem:[#allocation2 + $0x8] sm:$0xff]
    %v46 = vld [vmem:[#allocation5] sm:$0xff]
    %v47 = vld [vmem:[#allocation5 + $0x8] sm:$0xff]
    %v48 = vld [vmem:[#allocation5 + $0x10] sm:$0xff]
    %v49 = vld [vmem:[#allocation5 + $0x18] sm:$0xff]
    %v50 = vld [vmem:[#allocation5 + $0x20] sm:$0xff]
    %v51 = vld [vmem:[#allocation5 + $0x28] sm:$0xff]
    %v52 = vld [vmem:[#allocation5 + $0x30] sm:$0xff]
    %v53 = vld [vmem:[#allocation5 + $0x38] sm:$0xff]
    %v54 = vld [vmem:[#allocation5 + $0x40] sm:$0xff]
    %v55 = vld [vmem:[#allocation5 + $0x48] sm:$0xff]
    %v56 = vld [vmem:[#allocation5 + $0x50] sm:$0xff]
    %v57 = vld [vmem:[#allocation5 + $0x58] sm:$0xff]
    %vm58 = vcmask 261120
    %v60 = vsel %vm58, %v44, 0
    %v63 = vsel %vm58, %v45, 0
    %65 = vmatpush.msra.mxu0 0.0
    %66 = vmatpush.msra.mxu0 0.0
    %67 = vmatpush.msra.mxu0 0.0
    %68 = vmatpush.msra.mxu0 0.0
    %69 = vmatpush.msra.mxu0 0.0
    %70 = vmatpush.msra.mxu0 0.0
    %71 = vmatpush.msra.mxu0 0.0
    %72 = vmatpush.msra.mxu0 0.0
    %73 = vmatpush.msra.mxu0 0.0
    %74 = vmatpush.msra.mxu0 0.0
    %75 = vmatpush.msra.mxu0 0.0
    %76 = vmatpush.msra.mxu0 0.0
    %77 = vmatpush.msra.mxu0 %v55
    %78 = vmatpush.msra.mxu0 %v52
    %79 = vmatpush.msra.mxu0 %v49
    %80 = vmatpush.msra.mxu0 %v46
    %81 = vmatmul.f32.gmra.mxu0 %v60
    %v82 = vpop.f32.mrf.mxu0
    %v83 = vadd.f32 0.0, %v82
    %84 = vmatmul.f32.gmra.mxu0 %v63
    %v85 = vpop.f32.mrf.mxu0
    %v86 = vadd.f32 0.0, %v85
    %87 = vdwg.mxu0
    %88 = vmatpush.msra.mxu0 0.0
    %89 = vmatpush.msra.mxu0 0.0
    %90 = vmatpush.msra.mxu0 0.0
    %91 = vmatpush.msra.mxu0 0.0
    %92 = vmatpush.msra.mxu0 0.0
    %93 = vmatpush.msra.mxu0 0.0
    %94 = vmatpush.msra.mxu0 0.0
    %95 = vmatpush.msra.mxu0 0.0
    %96 = vmatpush.msra.mxu0 0.0
    %97 = vmatpush.msra.mxu0 0.0
    %98 = vmatpush.msra.mxu0 0.0
    %99 = vmatpush.msra.mxu0 0.0
    %100 = vmatpush.msra.mxu0 %v56
    %101 = vmatpush.msra.mxu0 %v53
    %102 = vmatpush.msra.mxu0 %v50
    %103 = vmatpush.msra.mxu0 %v47
    %104 = vmatmul.f32.gmra.mxu0 %v60
    %v105 = vpop.f32.mrf.mxu0
    %v106 = vadd.f32 0.0, %v105
    %107 = vmatmul.f32.gmra.mxu0 %v63
    %v108 = vpop.f32.mrf.mxu0
    %v109 = vadd.f32 0.0, %v108
    %110 = vdwg.mxu0
    %111 = vmatpush.msra.mxu0 0.0
    %112 = vmatpush.msra.mxu0 0.0
    %113 = vmatpush.msra.mxu0 0.0
    %114 = vmatpush.msra.mxu0 0.0
    %115 = vmatpush.msra.mxu0 0.0
    %116 = vmatpush.msra.mxu0 0.0
    %117 = vmatpush.msra.mxu0 0.0
    %118 = vmatpush.msra.mxu0 0.0
    %119 = vmatpush.msra.mxu0 0.0
    %120 = vmatpush.msra.mxu0 0.0
    %121 = vmatpush.msra.mxu0 0.0
    %122 = vmatpush.msra.mxu0 0.0
    %123 = vmatpush.msra.mxu0 %v57
    %124 = vmatpush.msra.mxu0 %v54
    %125 = vmatpush.msra.mxu0 %v51
    %126 = vmatpush.msra.mxu0 %v48
    %127 = vmatmul.f32.gmra.mxu0 %v60
    %v128 = vpop.f32.mrf.mxu0
    %v129 = vadd.f32 0.0, %v128
    %130 = vmatmul.f32.gmra.mxu0 %v63
    %v131 = vpop.f32.mrf.mxu0
    %v132 = vadd.f32 0.0, %v131
    %133 = vdwg.mxu0
    %v134 = vmul.f32 %v83, 0.17677669
    %v135 = vmul.f32 %v86, 0.17677669
    %136 = vmatpush.xpose.msra.mxu0 0.0
    %137 = vmatpush.xpose.msra.mxu0 0.0
    %138 = vmatpush.xpose.msra.mxu0 0.0
    %139 = vmatpush.xpose.msra.mxu0 0.0
    %140 = vmatpush.xpose.msra.mxu0 0.0
    %141 = vmatpush.xpose.msra.mxu0 0.0
    %142 = vmatpush.xpose.msra.mxu0 0.0
    %143 = vmatpush.xpose.msra.mxu0 0.0
    %144 = vmatpush.xpose.msra.mxu0 0.0
    %145 = vmatpush.xpose.msra.mxu0 0.0
    %146 = vmatpush.xpose.msra.mxu0 0.0
    %147 = vmatpush.xpose.msra.mxu0 0.0
    %148 = vmatpush.xpose.msra.mxu0 0.0
    %149 = vmatpush.xpose.msra.mxu0 0.0
    %150 = vmatpush.xpose.msra.mxu0 0.0
    %151 = vmatpush.xpose.msra.mxu0 %v106
    %152 = vmatmul.f32.gmra.mxu0 %v134
    %v153 = vpop.f32.mrf.mxu0
    %v154 = vadd.f32 0.0, %v153
    %155 = vdwg.mxu0
    %156 = vmatpush.xpose.msra.mxu0 0.0
    %157 = vmatpush.xpose.msra.mxu0 0.0
    %158 = vmatpush.xpose.msra.mxu0 0.0
    %159 = vmatpush.xpose.msra.mxu0 0.0
    %160 = vmatpush.xpose.msra.mxu0 0.0
    %161 = vmatpush.xpose.msra.mxu0 0.0
    %162 = vmatpush.xpose.msra.mxu0 0.0
    %163 = vmatpush.xpose.msra.mxu0 0.0
    %164 = vmatpush.xpose.msra.mxu0 0.0
    %165 = vmatpush.xpose.msra.mxu0 0.0
    %166 = vmatpush.xpose.msra.mxu0 0.0
    %167 = vmatpush.xpose.msra.mxu0 0.0
    %168 = vmatpush.xpose.msra.mxu0 0.0
    %169 = vmatpush.xpose.msra.mxu0 0.0
    %170 = vmatpush.xpose.msra.mxu0 0.0
    %171 = vmatpush.xpose.msra.mxu0 %v109
    %172 = vmatmul.f32.gmra.mxu0 %v135
    %v173 = vpop.f32.mrf.mxu0
    %v174 = vadd.f32 0.0, %v173
    %175 = vdwg.mxu0
    %vm176 = vcmask 64512
    %v177 = vsel %vm176, %v154, -inf
    %178 = vmax.xlane.f32.xlu0 %v177
    %v179 = vpop.xlane.xlu0 %178
    %v180 = vsel %vm176, %v174, -inf
    %181 = vmax.xlane.f32.xlu0 %v180
    %v182 = vpop.xlane.xlu0 %181
    %v183 = vsub.f32 %v154, %v179
    %v184 = vsub.f32 %v174, %v182
    %v185 = vmul.f32 %v183, 1.442695
    %v186 = vpow.pop %v185
    %v187 = vmul.f32 %v184, 1.442695
    %v188 = vpow.pop %v187
    %v189 = vsel %vm176, %v186, 0.0
    %190 = vadd.xlane.f32.xlu0 %v189
    %v191 = vpop.xlane.xlu0 %190
    %v192 = vsel %vm176, %v188, 0.0
    %193 = vadd.xlane.f32.xlu0 %v192
    %v194 = vpop.xlane.xlu0 %193
    %v196 = vsel %vm176, %v186, 0
    %198 = vmatpush.msra.mxu0 0.0
    %199 = vmatpush.msra.mxu0 0.0
    %200 = vmatpush.msra.mxu0 0.0
    %201 = vmatpush.msra.mxu0 0.0
    %202 = vmatpush.msra.mxu0 0.0
    %203 = vmatpush.msra.mxu0 0.0
    %204 = vmatpush.msra.mxu0 0.0
    %205 = vmatpush.msra.mxu0 0.0
    %206 = vmatpush.msra.mxu0 0.0
    %207 = vmatpush.msra.mxu0 0.0
    %208 = vmatpush.msra.mxu0 0.0
    %209 = vmatpush.msra.mxu0 0.0
    %210 = vmatpush.msra.mxu0 0.0
    %211 = vmatpush.msra.mxu0 0.0
    %212 = vmatpush.msra.mxu0 0.0
    %213 = vmatpush.msra.mxu0 %v129
    %214 = vmatmul.f32.gmra.mxu0 %v196
    %v215 = vpop.f32.mrf.mxu0
    %v216 = vadd.f32 0.0, %v215
    %217 = vdwg.mxu0
    %v219 = vsel %vm176, %v188, 0
    %221 = vmatpush.msra.mxu0 0.0
    %222 = vmatpush.msra.mxu0 0.0
    %223 = vmatpush.msra.mxu0 0.0
    %224 = vmatpush.msra.mxu0 0.0
    %225 = vmatpush.msra.mxu0 0.0
    %226 = vmatpush.msra.mxu0 0.0
    %227 = vmatpush.msra.mxu0 0.0
    %228 = vmatpush.msra.mxu0 0.0
    %229 = vmatpush.msra.mxu0 0.0
    %230 = vmatpush.msra.mxu0 0.0
    %231 = vmatpush.msra.mxu0 0.0
    %232 = vmatpush.msra.mxu0 0.0
    %233 = vmatpush.msra.mxu0 0.0
    %234 = vmatpush.msra.mxu0 0.0
    %235 = vmatpush.msra.mxu0 0.0
    %236 = vmatpush.msra.mxu0 %v132
    %237 = vmatmul.f32.gmra.mxu0 %v219
    %v238 = vpop.f32.mrf.mxu0
    %v239 = vadd.f32 0.0, %v238
    %240 = vdwg.mxu0
    %v241 = vrcp.pop %v191
    %v242 = vmul.f32 %v191, %v241
    %v243 = vsub.f32 1.0, %v242
    %v244 = vmul.f32 %v241, %v243
    %v245 = vadd.f32 %v241, %v244
    %vm246 = vweird.f32 %v191
    %vm247 = vweird.f32 %v241
    %vm248 = vmor %vm246, %vm247
    %v249 = vsel %vm248, %v241, %v245
    %v250 = vand.u32 2147483647, %v191
    %vm251 = vcmp.eq.f32.partialorder %v250, 8.507059e+37
    %v252 = vand.u32 %v191, 2147483648
    %v253 = vor.u32 1.1754944e-38, %v252
    %v254 = vsel %vm251, %v253, %v249
    %v255 = vmul.f32 %v216, %v254
    %v256 = vrcp.pop %v194
    %v257 = vmul.f32 %v194, %v256
    %v258 = vsub.f32 1.0, %v257
    %v259 = vmul.f32 %v256, %v258
    %v260 = vadd.f32 %v256, %v259
    %vm261 = vweird.f32 %v194
    %vm262 = vweird.f32 %v256
    %vm263 = vmor %vm261, %vm262
    %v264 = vsel %vm263, %v256, %v260
    %v265 = vand.u32 2147483647, %v194
    %vm266 = vcmp.eq.f32.partialorder %v265, 8.507059e+37
    %v267 = vand.u32 %v194, 2147483648
    %v268 = vor.u32 1.1754944e-38, %v267
    %v269 = vsel %vm266, %v268, %v264
    %v270 = vmul.f32 %v239, %v269
    %271 = vst.msk [vmem:[#allocation7] sm:$0xff] %vm58, %v255
    %272 = vst.msk [vmem:[#allocation7 + $0x8] sm:$0xff] %vm58, %v270
    // Predicated region
    $region18: #{tpu_custom_call.1} parent=1 // pred_check
      _
    $region19: #{tpu_custom_call.1} parent=1 // pred_check_branch
      %274 = sbr.rel (0) target = $region21
    $region20: #{tpu_custom_call.1} parent=1 // pred_region
      %276 = vsyncadd [#allocation4], 0
      %s277 = sshll.u32 [#allocation7], 4
      %s278 = int_to_ptr.vmem [resolvable:$true] %s277
      %s279 = sshll.u32 %s2, 4
      %s280 = int_to_ptr.hbm [resolvable:$true] %s279
      %285 = dma.vmem_to_hbm [thread:$0]  %s278, 256, %s280, [#allocation4], 128, 128, 8
    $region21: #{tpu_custom_call.1} parent=1 // pred_fallthru
      _
    // Predicated region
    $region22: #{tpu_custom_call.1} parent=1 // pred_check
      _
    $region23: #{tpu_custom_call.1} parent=1 // pred_check_branch
      %287 = sbr.rel (0) target = $region25
    $region24: #{tpu_custom_call.1} parent=1 // pred_region
      %289 = dma.done [#allocation4], 256
    $region25: #{tpu_custom_call.1} parent=1 // pred_fallthru
      _
    %290 = vsyncpa [#allocation3], 1
    %291 = vsyncpa [#allocation6], 1
    %292 = vsyncpa [#allocation4], 1

</llo_original>
